<compile_context>
chip_gen: v5e
topology: v5e:2x2
jax: 0.10.0
libtpu: 0.0.40
codegen_flags: <defaults>
</compile_context>

<pallas_src>
import numpy as np

import jax
import jax.numpy as jnp
from jax import lax
from jax.experimental import pallas as pl
from jax.experimental.pallas import tpu as pltpu

EPS = 1e-5


# ----------------------------- weight plumbing ------------------------------
def _reflect_tap_matrix(W: int) -> np.ndarray:
    """P[dx, w_in, w_out] = 1 where horizontal tap dx of output column w_out
    reads input column w_in under PyTorch padding_mode='reflect' (pad=1)."""
    P = np.zeros((3, W, W), np.float32)
    for w in range(W):
        for dx in range(3):
            win = w + dx - 1
            if win < 0:
                win = -win
            elif win > W - 1:
                win = 2 * (W - 1) - win
            P[dx, win, w] += 1.0
    return P


def _toeplitz_weights(w_oihw, W):
    """Torch conv weight (Cout, Cin, 3, 3) -> (3, W*Cin, W*Cout) block-Toeplitz
    matrices (one per dy) with the reflect column padding baked in."""
    Cout, Cin, _, _ = w_oihw.shape
    P = jnp.asarray(_reflect_tap_matrix(W))                       # (3, W, W)
    T = jnp.einsum("xuw,oiyx->yuiwo", P, w_oihw,
                   precision=lax.Precision.HIGHEST)               # (3,W,Ci,W,Co)
    return T.reshape(3, W * Cin, W * Cout)


def _channel_mean_matrix(H, W, C) -> np.ndarray:
    """S[l1, l2] = 1/(H*W) where l1 % C == l2 % C.  Right-multiplying an
    (H, W*C) tile by S and summing rows yields per-channel means broadcast
    back to every (w, c) lane."""
    l = np.arange(W * C)
    return ((l[:, None] % C) == (l[None, :] % C)).astype(np.float32) / (H * W)


# --------------------------------- kernel -----------------------------------
def _residual_block_kernel(x_ref, w1_ref, b1_ref, w2_ref, b2_ref, s_ref,
                           out_ref, xpad_ref):
    H = x_ref.shape[1]
    x = x_ref[0]                                           # (H, W*C) f32

    def conv_in_stage(y_in, w_ref, b_ref):
        # Vertical reflect padding: row r of scratch holds y_in[reflect(r-1)].
        xpad_ref[1:H + 1, :] = y_in
        xpad_ref[0:1, :] = y_in[1:2, :]
        xpad_ref[H + 1:H + 2, :] = y_in[H - 2:H - 1, :]
        # 3x3 reflect conv == 3 lane-dense MXU matmuls (horizontal taps and
        # reflect column padding live inside the block-Toeplitz weights).
        acc = jnp.dot(xpad_ref[0:H, :], w_ref[0],
                      preferred_element_type=jnp.float32)
        acc = acc + jnp.dot(xpad_ref[1:H + 1, :], w_ref[1],
                            preferred_element_type=jnp.float32)
        acc = acc + jnp.dot(xpad_ref[2:H + 2, :], w_ref[2],
                            preferred_element_type=jnp.float32)
        acc = acc + b_ref[...]                             # (1, W*C) broadcast
        # InstanceNorm2d: one-pass per-channel stats (E[x], E[x^2]); the
        # strided-lane reduce + broadcast is a selector matmul (stays lane-
        # dense, MXU slot), followed by a cheap sublane sum.
        mean = jnp.sum(jnp.dot(acc, s_ref[...],
                               preferred_element_type=jnp.float32),
                       axis=0, keepdims=True)              # (1, W*C)
        ex2 = jnp.sum(jnp.dot(acc * acc, s_ref[...],
                              preferred_element_type=jnp.float32),
                      axis=0, keepdims=True)               # (1, W*C)
        var = ex2 - mean * mean
        return (acc - mean) * lax.rsqrt(var + EPS)

    y1 = jnp.maximum(conv_in_stage(x, w1_ref, b1_ref), 0.0)   # stage 1 + ReLU
    y2 = conv_in_stage(y1, w2_ref, b2_ref)                    # stage 2, no act
    out_ref[0] = (x + y2).astype(out_ref.dtype)               # residual add


# -------------------------------- wrapper ------------------------------------
def residual_block(x_nchw, params):
    """x_nchw: (N, C, H, W) f32. params: PyTorch-layout conv weights/biases."""
    N, C, H, W = x_nchw.shape
    WC = W * C                                 # lane axis (128 when W*C = 128)
    x_lane = jnp.transpose(x_nchw, (0, 2, 3, 1)).reshape(N, H, WC)

    w1 = _toeplitz_weights(params["w1"], W)            # (3, WC, WC)
    w2 = _toeplitz_weights(params["w2"], W)
    b1 = jnp.tile(params["b1"], W)[None, :]            # (1, WC)
    b2 = jnp.tile(params["b2"], W)[None, :]
    sel = jnp.asarray(_channel_mean_matrix(H, W, C))   # (WC, WC)

    out_lane = pl.pallas_call(
        _residual_block_kernel,
        out_shape=jax.ShapeDtypeStruct((N, H, WC), x_nchw.dtype),
        grid=(N,),
        in_specs=[
            pl.BlockSpec((1, H, WC), lambda n: (n, 0, 0)),      # x (one image)
            pl.BlockSpec((3, WC, WC), lambda n: (0, 0, 0)),     # W1 Toeplitz
            pl.BlockSpec((1, WC), lambda n: (0, 0)),            # b1
            pl.BlockSpec((3, WC, WC), lambda n: (0, 0, 0)),     # W2 Toeplitz
            pl.BlockSpec((1, WC), lambda n: (0, 0)),            # b2
            pl.BlockSpec((WC, WC), lambda n: (0, 0)),           # channel selector
        ],
        out_specs=pl.BlockSpec((1, H, WC), lambda n: (n, 0, 0)),
        scratch_shapes=[pltpu.VMEM((H + 2, WC), jnp.float32)],  # row-padded act
        compiler_params=pltpu.CompilerParams(
            dimension_semantics=("parallel",)),
    )(x_lane, w1, b1, w2, b2, sel)

    return jnp.transpose(out_lane.reshape(N, H, W, C), (0, 3, 1, 2))


# ----------------------- pure-JAX reference (checking) -----------------------
def _ref_stage(x, w, b, use_act):
    xpad = jnp.pad(x, ((0, 0), (0, 0), (1, 1), (1, 1)), mode="reflect")
    y = lax.conv_general_dilated(
        xpad, w, window_strides=(1, 1), padding="VALID",
        dimension_numbers=("NCHW", "OIHW", "NCHW"),
        precision=lax.Precision.HIGHEST) + b.reshape(1, -1, 1, 1)
    mean = y.mean(axis=(2, 3), keepdims=True)
    var = ((y - mean) ** 2).mean(axis=(2, 3), keepdims=True)
    y = (y - mean) / jnp.sqrt(var + EPS)
    if use_act:
        y = jnp.maximum(y, 0.0)
    return y


def _ref_residual_block(x, params):
    y1 = _ref_stage(x, params["w1"], params["b1"], use_act=True)
    y2 = _ref_stage(y1, params["w2"], params["b2"], use_act=False)
    return x + y2


# ----------------------------------- main ------------------------------------
if __name__ == "__main__":
    key = jax.random.PRNGKey(0)
    N, C, H, W = 2, 8, 16, 16          # PyTorch input (N, C, H, W); W*C = 128

    k_x, k_w1, k_b1, k_w2, k_b2 = jax.random.split(key, 5)
    x = jax.random.normal(k_x, (N, C, H, W), jnp.float32)

    # Parameters in native PyTorch Conv2d layout: weight (Cout, Cin, 3, 3).
    params = {
        "w1": 0.1 * jax.random.normal(k_w1, (C, C, 3, 3), jnp.float32),
        "b1": 0.1 * jax.random.normal(k_b1, (C,), jnp.float32),
        "w2": 0.1 * jax.random.normal(k_w2, (C, C, 3, 3), jnp.float32),
        "b2": 0.1 * jax.random.normal(k_b2, (C,), jnp.float32),
    }

    out = jax.block_until_ready(jax.jit(residual_block)(x, params))

    ref = _ref_residual_block(x, params)
    assert out.shape == (N, C, H, W)
    assert jnp.allclose(out, ref, rtol=1e-4, atol=1e-4), "mismatch vs reference"

    print("KERNEL_OK")
</pallas_src>

<mosaic_0001>
module attributes {stable_mosaic.version = 11 : i64} {
  func.func @_residual_block_kernel(%arg0: i32, %arg1: memref<1x16x128xf32, #tpu.memory_space<vmem>>, %arg2: memref<3x128x128xf32, #tpu.memory_space<vmem>>, %arg3: memref<1x128xf32, #tpu.memory_space<vmem>>, %arg4: memref<3x128x128xf32, #tpu.memory_space<vmem>>, %arg5: memref<1x128xf32, #tpu.memory_space<vmem>>, %arg6: memref<128x128xf32, #tpu.memory_space<vmem>>, %arg7: memref<1x16x128xf32, #tpu.memory_space<vmem>>, %arg8: memref<18x128xf32, #tpu.memory_space<vmem>>) attributes {dimension_semantics = [#tpu.dimension_semantics<parallel>], iteration_bounds = array<i64: 2>, scalar_prefetch = 0 : i64, scratch_operands = 1 : i64, tpu.core_type = #tpu.core_type<tc>, window_params = [{transform_indices = @transform_0, window_bounds = array<i64: 1, 16, 128>}, {pipeline_mode = #tpu.pipeline_mode<synchronous>, transform_indices = @transform_1, window_bounds = array<i64: 3, 128, 128>}, {pipeline_mode = #tpu.pipeline_mode<synchronous>, transform_indices = @transform_2, window_bounds = array<i64: 1, 128>}, {pipeline_mode = #tpu.pipeline_mode<synchronous>, transform_indices = @transform_3, window_bounds = array<i64: 3, 128, 128>}, {pipeline_mode = #tpu.pipeline_mode<synchronous>, transform_indices = @transform_4, window_bounds = array<i64: 1, 128>}, {pipeline_mode = #tpu.pipeline_mode<synchronous>, transform_indices = @transform_5, window_bounds = array<i64: 128, 128>}, {transform_indices = @transform_6, window_bounds = array<i64: 1, 16, 128>}]} {
    %c0 = arith.constant 0 : index
    %c0_0 = arith.constant 0 : index
    %c0_1 = arith.constant 0 : index
    %0 = vector.load %arg1[%c0, %c0_0, %c0_1] : memref<1x16x128xf32, #tpu.memory_space<vmem>>, vector<1x16x128xf32>
    %1 = vector.shape_cast %0 : vector<1x16x128xf32> to vector<16x128xf32>
    %c1 = arith.constant 1 : index
    %c0_2 = arith.constant 0 : index
    %2 = vector.load %arg8[%c1, %c0_2] : memref<18x128xf32, #tpu.memory_space<vmem>>, vector<16x128xf32>
    tpu.vector_store %arg8[%c1, %c0_2], %1 {strides = array<i32>} : memref<18x128xf32, #tpu.memory_space<vmem>>, vector<16x128xf32>,
    %3 = vector.extract_strided_slice %1 {offsets = [1, 0], sizes = [1, 128], strides = [1, 1]} : vector<16x128xf32> to vector<1x128xf32>
    %c0_3 = arith.constant 0 : index
    %c0_4 = arith.constant 0 : index
    %4 = vector.load %arg8[%c0_3, %c0_4] : memref<18x128xf32, #tpu.memory_space<vmem>>, vector<1x128xf32>
    tpu.vector_store %arg8[%c0_3, %c0_4], %3 {strides = array<i32>} : memref<18x128xf32, #tpu.memory_space<vmem>>, vector<1x128xf32>,
    %5 = vector.extract_strided_slice %1 {offsets = [14, 0], sizes = [1, 128], strides = [1, 1]} : vector<16x128xf32> to vector<1x128xf32>
    %c17 = arith.constant 17 : index
    %c0_5 = arith.constant 0 : index
    %6 = vector.load %arg8[%c17, %c0_5] : memref<18x128xf32, #tpu.memory_space<vmem>>, vector<1x128xf32>
    tpu.vector_store %arg8[%c17, %c0_5], %5 {strides = array<i32>} : memref<18x128xf32, #tpu.memory_space<vmem>>, vector<1x128xf32>,
    %c0_6 = arith.constant 0 : index
    %c0_7 = arith.constant 0 : index
    %7 = vector.load %arg8[%c0_6, %c0_7] : memref<18x128xf32, #tpu.memory_space<vmem>>, vector<16x128xf32>
    %c0_8 = arith.constant 0 : index
    %c0_9 = arith.constant 0 : index
    %c0_10 = arith.constant 0 : index
    %8 = vector.load %arg2[%c0_8, %c0_9, %c0_10] : memref<3x128x128xf32, #tpu.memory_space<vmem>>, vector<1x128x128xf32>
    %9 = vector.shape_cast %8 : vector<1x128x128xf32> to vector<128x128xf32>
    %cst = arith.constant dense<0.000000e+00> : vector<16x128xf32>
    %10 = tpu.matmul %7, %9, %cst {dimension_numbers = #tpu.dot_dimension_numbers<[1], [0], [0], [1], [0, 0, 1, 1], [], []>} : vector<16x128xf32>, vector<128x128xf32>, vector<16x128xf32> -> vector<16x128xf32>
    %c1_11 = arith.constant 1 : index
    %c0_12 = arith.constant 0 : index
    %11 = vector.load %arg8[%c1_11, %c0_12] : memref<18x128xf32, #tpu.memory_space<vmem>>, vector<16x128xf32>
    %c1_13 = arith.constant 1 : index
    %c0_14 = arith.constant 0 : index
    %c0_15 = arith.constant 0 : index
    %12 = vector.load %arg2[%c1_13, %c0_14, %c0_15] : memref<3x128x128xf32, #tpu.memory_space<vmem>>, vector<1x128x128xf32>
    %13 = vector.shape_cast %12 : vector<1x128x128xf32> to vector<128x128xf32>
    %cst_16 = arith.constant dense<0.000000e+00> : vector<16x128xf32>
    %14 = tpu.matmul %11, %13, %cst_16 {dimension_numbers = #tpu.dot_dimension_numbers<[1], [0], [0], [1], [0, 0, 1, 1], [], []>} : vector<16x128xf32>, vector<128x128xf32>, vector<16x128xf32> -> vector<16x128xf32>
    %15 = arith.addf %10, %14 : vector<16x128xf32>
    %c2 = arith.constant 2 : index
    %c0_17 = arith.constant 0 : index
    %16 = vector.load %arg8[%c2, %c0_17] : memref<18x128xf32, #tpu.memory_space<vmem>>, vector<16x128xf32>
    %c2_18 = arith.constant 2 : index
    %c0_19 = arith.constant 0 : index
    %c0_20 = arith.constant 0 : index
    %17 = vector.load %arg2[%c2_18, %c0_19, %c0_20] : memref<3x128x128xf32, #tpu.memory_space<vmem>>, vector<1x128x128xf32>
    %18 = vector.shape_cast %17 : vector<1x128x128xf32> to vector<128x128xf32>
    %cst_21 = arith.constant dense<0.000000e+00> : vector<16x128xf32>
    %19 = tpu.matmul %16, %18, %cst_21 {dimension_numbers = #tpu.dot_dimension_numbers<[1], [0], [0], [1], [0, 0, 1, 1], [], []>} : vector<16x128xf32>, vector<128x128xf32>, vector<16x128xf32> -> vector<16x128xf32>
    %20 = arith.addf %15, %19 : vector<16x128xf32>
    %c0_22 = arith.constant 0 : index
    %c0_23 = arith.constant 0 : index
    %21 = vector.load %arg3[%c0_22, %c0_23] : memref<1x128xf32, #tpu.memory_space<vmem>>, vector<1x128xf32>
    %22 = vector.broadcast %21 : vector<1x128xf32> to vector<16x128xf32>
    %23 = arith.addf %20, %22 : vector<16x128xf32>
    %c0_24 = arith.constant 0 : index
    %c0_25 = arith.constant 0 : index
    %24 = vector.load %arg6[%c0_24, %c0_25] : memref<128x128xf32, #tpu.memory_space<vmem>>, vector<128x128xf32>
    %cst_26 = arith.constant dense<0.000000e+00> : vector<16x128xf32>
    %25 = tpu.matmul %23, %24, %cst_26 {dimension_numbers = #tpu.dot_dimension_numbers<[1], [0], [0], [1], [0, 0, 1, 1], [], []>} : vector<16x128xf32>, vector<128x128xf32>, vector<16x128xf32> -> vector<16x128xf32>
    %cst_27 = arith.constant dense<0.000000e+00> : vector<128xf32>
    %26 = vector.multi_reduction <add>, %25, %cst_27 [0] : vector<16x128xf32> to vector<128xf32>
    %27 = vector.shape_cast %26 : vector<128xf32> to vector<1x128xf32>
    %28 = arith.mulf %23, %23 : vector<16x128xf32>
    %c0_28 = arith.constant 0 : index
    %c0_29 = arith.constant 0 : index
    %29 = vector.load %arg6[%c0_28, %c0_29] : memref<128x128xf32, #tpu.memory_space<vmem>>, vector<128x128xf32>
    %cst_30 = arith.constant dense<0.000000e+00> : vector<16x128xf32>
    %30 = tpu.matmul %28, %29, %cst_30 {dimension_numbers = #tpu.dot_dimension_numbers<[1], [0], [0], [1], [0, 0, 1, 1], [], []>} : vector<16x128xf32>, vector<128x128xf32>, vector<16x128xf32> -> vector<16x128xf32>
    %cst_31 = arith.constant dense<0.000000e+00> : vector<128xf32>
    %31 = vector.multi_reduction <add>, %30, %cst_31 [0] : vector<16x128xf32> to vector<128xf32>
    %32 = vector.shape_cast %31 : vector<128xf32> to vector<1x128xf32>
    %33 = arith.mulf %27, %27 : vector<1x128xf32>
    %34 = arith.subf %32, %33 : vector<1x128xf32>
    %35 = vector.broadcast %27 : vector<1x128xf32> to vector<16x128xf32>
    %36 = arith.subf %23, %35 : vector<16x128xf32>
    %cst_32 = arith.constant 9.99999974E-6 : f32
    %37 = vector.broadcast %cst_32 : f32 to vector<1x128xf32>
    %38 = arith.addf %34, %37 : vector<1x128xf32>
    %39 = math.rsqrt %38 : vector<1x128xf32>
    %40 = vector.broadcast %39 : vector<1x128xf32> to vector<16x128xf32>
    %41 = arith.mulf %36, %40 : vector<16x128xf32>
    %cst_33 = arith.constant 0.000000e+00 : f32
    %42 = vector.broadcast %cst_33 : f32 to vector<16x128xf32>
    %43 = arith.maximumf %41, %42 : vector<16x128xf32>
    %c1_34 = arith.constant 1 : index
    %c0_35 = arith.constant 0 : index
    %44 = vector.load %arg8[%c1_34, %c0_35] : memref<18x128xf32, #tpu.memory_space<vmem>>, vector<16x128xf32>
    tpu.vector_store %arg8[%c1_34, %c0_35], %43 {strides = array<i32>} : memref<18x128xf32, #tpu.memory_space<vmem>>, vector<16x128xf32>,
    %45 = vector.extract_strided_slice %43 {offsets = [1, 0], sizes = [1, 128], strides = [1, 1]} : vector<16x128xf32> to vector<1x128xf32>
    %c0_36 = arith.constant 0 : index
    %c0_37 = arith.constant 0 : index
    %46 = vector.load %arg8[%c0_36, %c0_37] : memref<18x128xf32, #tpu.memory_space<vmem>>, vector<1x128xf32>
    tpu.vector_store %arg8[%c0_36, %c0_37], %45 {strides = array<i32>} : memref<18x128xf32, #tpu.memory_space<vmem>>, vector<1x128xf32>,
    %47 = vector.extract_strided_slice %43 {offsets = [14, 0], sizes = [1, 128], strides = [1, 1]} : vector<16x128xf32> to vector<1x128xf32>
    %c17_38 = arith.constant 17 : index
    %c0_39 = arith.constant 0 : index
    %48 = vector.load %arg8[%c17_38, %c0_39] : memref<18x128xf32, #tpu.memory_space<vmem>>, vector<1x128xf32>
    tpu.vector_store %arg8[%c17_38, %c0_39], %47 {strides = array<i32>} : memref<18x128xf32, #tpu.memory_space<vmem>>, vector<1x128xf32>,
    %c0_40 = arith.constant 0 : index
    %c0_41 = arith.constant 0 : index
    %49 = vector.load %arg8[%c0_40, %c0_41] : memref<18x128xf32, #tpu.memory_space<vmem>>, vector<16x128xf32>
    %c0_42 = arith.constant 0 : index
    %c0_43 = arith.constant 0 : index
    %c0_44 = arith.constant 0 : index
    %50 = vector.load %arg4[%c0_42, %c0_43, %c0_44] : memref<3x128x128xf32, #tpu.memory_space<vmem>>, vector<1x128x128xf32>
    %51 = vector.shape_cast %50 : vector<1x128x128xf32> to vector<128x128xf32>
    %cst_45 = arith.constant dense<0.000000e+00> : vector<16x128xf32>
    %52 = tpu.matmul %49, %51, %cst_45 {dimension_numbers = #tpu.dot_dimension_numbers<[1], [0], [0], [1], [0, 0, 1, 1], [], []>} : vector<16x128xf32>, vector<128x128xf32>, vector<16x128xf32> -> vector<16x128xf32>
    %c1_46 = arith.constant 1 : index
    %c0_47 = arith.constant 0 : index
    %53 = vector.load %arg8[%c1_46, %c0_47] : memref<18x128xf32, #tpu.memory_space<vmem>>, vector<16x128xf32>
    %c1_48 = arith.constant 1 : index
    %c0_49 = arith.constant 0 : index
    %c0_50 = arith.constant 0 : index
    %54 = vector.load %arg4[%c1_48, %c0_49, %c0_50] : memref<3x128x128xf32, #tpu.memory_space<vmem>>, vector<1x128x128xf32>
    %55 = vector.shape_cast %54 : vector<1x128x128xf32> to vector<128x128xf32>
    %cst_51 = arith.constant dense<0.000000e+00> : vector<16x128xf32>
    %56 = tpu.matmul %53, %55, %cst_51 {dimension_numbers = #tpu.dot_dimension_numbers<[1], [0], [0], [1], [0, 0, 1, 1], [], []>} : vector<16x128xf32>, vector<128x128xf32>, vector<16x128xf32> -> vector<16x128xf32>
    %57 = arith.addf %52, %56 : vector<16x128xf32>
    %c2_52 = arith.constant 2 : index
    %c0_53 = arith.constant 0 : index
    %58 = vector.load %arg8[%c2_52, %c0_53] : memref<18x128xf32, #tpu.memory_space<vmem>>, vector<16x128xf32>
    %c2_54 = arith.constant 2 : index
    %c0_55 = arith.constant 0 : index
    %c0_56 = arith.constant 0 : index
    %59 = vector.load %arg4[%c2_54, %c0_55, %c0_56] : memref<3x128x128xf32, #tpu.memory_space<vmem>>, vector<1x128x128xf32>
    %60 = vector.shape_cast %59 : vector<1x128x128xf32> to vector<128x128xf32>
    %cst_57 = arith.constant dense<0.000000e+00> : vector<16x128xf32>
    %61 = tpu.matmul %58, %60, %cst_57 {dimension_numbers = #tpu.dot_dimension_numbers<[1], [0], [0], [1], [0, 0, 1, 1], [], []>} : vector<16x128xf32>, vector<128x128xf32>, vector<16x128xf32> -> vector<16x128xf32>
    %62 = arith.addf %57, %61 : vector<16x128xf32>
    %c0_58 = arith.constant 0 : index
    %c0_59 = arith.constant 0 : index
    %63 = vector.load %arg5[%c0_58, %c0_59] : memref<1x128xf32, #tpu.memory_space<vmem>>, vector<1x128xf32>
    %64 = vector.broadcast %63 : vector<1x128xf32> to vector<16x128xf32>
    %65 = arith.addf %62, %64 : vector<16x128xf32>
    %c0_60 = arith.constant 0 : index
    %c0_61 = arith.constant 0 : index
    %66 = vector.load %arg6[%c0_60, %c0_61] : memref<128x128xf32, #tpu.memory_space<vmem>>, vector<128x128xf32>
    %cst_62 = arith.constant dense<0.000000e+00> : vector<16x128xf32>
    %67 = tpu.matmul %65, %66, %cst_62 {dimension_numbers = #tpu.dot_dimension_numbers<[1], [0], [0], [1], [0, 0, 1, 1], [], []>} : vector<16x128xf32>, vector<128x128xf32>, vector<16x128xf32> -> vector<16x128xf32>
    %cst_63 = arith.constant dense<0.000000e+00> : vector<128xf32>
    %68 = vector.multi_reduction <add>, %67, %cst_63 [0] : vector<16x128xf32> to vector<128xf32>
    %69 = vector.shape_cast %68 : vector<128xf32> to vector<1x128xf32>
    %70 = arith.mulf %65, %65 : vector<16x128xf32>
    %c0_64 = arith.constant 0 : index
    %c0_65 = arith.constant 0 : index
    %71 = vector.load %arg6[%c0_64, %c0_65] : memref<128x128xf32, #tpu.memory_space<vmem>>, vector<128x128xf32>
    %cst_66 = arith.constant dense<0.000000e+00> : vector<16x128xf32>
    %72 = tpu.matmul %70, %71, %cst_66 {dimension_numbers = #tpu.dot_dimension_numbers<[1], [0], [0], [1], [0, 0, 1, 1], [], []>} : vector<16x128xf32>, vector<128x128xf32>, vector<16x128xf32> -> vector<16x128xf32>
    %cst_67 = arith.constant dense<0.000000e+00> : vector<128xf32>
    %73 = vector.multi_reduction <add>, %72, %cst_67 [0] : vector<16x128xf32> to vector<128xf32>
    %74 = vector.shape_cast %73 : vector<128xf32> to vector<1x128xf32>
    %75 = arith.mulf %69, %69 : vector<1x128xf32>
    %76 = arith.subf %74, %75 : vector<1x128xf32>
    %77 = vector.broadcast %69 : vector<1x128xf32> to vector<16x128xf32>
    %78 = arith.subf %65, %77 : vector<16x128xf32>
    %cst_68 = arith.constant 9.99999974E-6 : f32
    %79 = vector.broadcast %cst_68 : f32 to vector<1x128xf32>
    %80 = arith.addf %76, %79 : vector<1x128xf32>
    %81 = math.rsqrt %80 : vector<1x128xf32>
    %82 = vector.broadcast %81 : vector<1x128xf32> to vector<16x128xf32>
    %83 = arith.mulf %78, %82 : vector<16x128xf32>
    %84 = arith.addf %1, %83 : vector<16x128xf32>
    %c0_69 = arith.constant 0 : index
    %c0_70 = arith.constant 0 : index
    %c0_71 = arith.constant 0 : index
    %85 = vector.load %arg7[%c0_69, %c0_70, %c0_71] : memref<1x16x128xf32, #tpu.memory_space<vmem>>, vector<1x16x128xf32>
    %86 = vector.shape_cast %85 : vector<1x16x128xf32> to vector<16x128xf32>
    %87 = vector.shape_cast %84 : vector<16x128xf32> to vector<1x16x128xf32>
    tpu.vector_store %arg7[%c0_69, %c0_70, %c0_71], %87 {strides = array<i32>} : memref<1x16x128xf32, #tpu.memory_space<vmem>>, vector<1x16x128xf32>,
    return
  }
  func.func @transform_0(%arg0: i32) -> (i32, i32, i32) {
    %c0_i32 = arith.constant 0 : i32
    %c0_i32_0 = arith.constant 0 : i32
    %c0_i32_1 = arith.constant 0 : i32
    return %arg0, %c0_i32, %c0_i32_0 : i32, i32, i32
  }
  func.func @transform_1(%arg0: i32) -> (i32, i32, i32) {
    %c0_i32 = arith.constant 0 : i32
    %c0_i32_0 = arith.constant 0 : i32
    %c0_i32_1 = arith.constant 0 : i32
    %c0_i32_2 = arith.constant 0 : i32
    return %c0_i32, %c0_i32_0, %c0_i32_1 : i32, i32, i32
  }
  func.func @transform_2(%arg0: i32) -> (i32, i32) {
    %c0_i32 = arith.constant 0 : i32
    %c0_i32_0 = arith.constant 0 : i32
    %c0_i32_1 = arith.constant 0 : i32
    return %c0_i32, %c0_i32_0 : i32, i32
  }
  func.func @transform_3(%arg0: i32) -> (i32, i32, i32) {
    %c0_i32 = arith.constant 0 : i32
    %c0_i32_0 = arith.constant 0 : i32
    %c0_i32_1 = arith.constant 0 : i32
    %c0_i32_2 = arith.constant 0 : i32
    return %c0_i32, %c0_i32_0, %c0_i32_1 : i32, i32, i32
  }
  func.func @transform_4(%arg0: i32) -> (i32, i32) {
    %c0_i32 = arith.constant 0 : i32
    %c0_i32_0 = arith.constant 0 : i32
    %c0_i32_1 = arith.constant 0 : i32
    return %c0_i32, %c0_i32_0 : i32, i32
  }
  func.func @transform_5(%arg0: i32) -> (i32, i32) {
    %c0_i32 = arith.constant 0 : i32
    %c0_i32_0 = arith.constant 0 : i32
    %c0_i32_1 = arith.constant 0 : i32
    return %c0_i32, %c0_i32_0 : i32, i32
  }
  func.func @transform_6(%arg0: i32) -> (i32, i32, i32) {
    %c0_i32 = arith.constant 0 : i32
    %c0_i32_0 = arith.constant 0 : i32
    %c0_i32_1 = arith.constant 0 : i32
    return %arg0, %c0_i32, %c0_i32_0 : i32, i32, i32
  }
}

</mosaic_0001>

<llo_original>
// kernel: tile.13
$region0: #{tile.13}
  #allocation0 [shape = 's32[1]{0}', space=sflag, size = 0x4, scoped, tag = 'scoped memory for tile.13']
  %s0 = inlined_call_operand.vmem [shape: f32[8], index: 0, kind: input, shape index: {}]
  %s1 = inlined_call_operand.vmem [shape: f32[16,8], index: 1, kind: output, shape index: {}]
  // Predicated region
  $region2: #{tile.13} parent=0 // pred_check
    _
  $region3: #{tile.13} parent=0 // pred_check_branch
    %3 = sbr.rel (0) target = $region5
  $region4: #{tile.13} parent=0 // pred_region
    _
  $region5: #{tile.13} parent=0 // pred_fallthru
    _
  %v4 = vld [vmem:[%s0] ss:$0 sm:$0xff]
  %5 = vst [vmem:[%s1] sm:$0xff] %v4
  %s6 = scalar_lea.vmem %s1, 8
  %7 = vst [vmem:[%s6] sm:$0xff] %v4

// kernel: tile.14
$region0: #{tile.14}
  %s0 = inlined_call_operand.vmem [shape: f32[16,8], index: 0, kind: input, shape index: {}]
  %s1 = inlined_call_operand.vmem [shape: f32[1,128], index: 1, kind: output, shape index: {}]
  $region1: #{tile.14} parent=0
    #allocation0 [shape = 'u8[4096]{0}', space=vmem, size = 0x1000, scoped, tag = 'scoped mem for output reshape']
    %v2 = vld [vmem:[%s0] sm:$0x1]
    %vm3 = vcmask 64512
    %4 = vst.msk [vmem:[#allocation0] sm:$0x1] %vm3, %v2
    %s5 = scalar_lea.vmem %s0, 15
    %v6 = vld [vmem:[%s5] sm:$0x1]
    %7 = vrot.lane.b32.xlu0 %v6, 120
    %v8 = vpop.permute.xlu0 %7
    %vm9 = vcmask 1048512
    %10 = vst.msk [vmem:[#allocation0] sm:$0x1] %vm9, %v8
    %s11 = scalar_lea.vmem %s0, 14
    %v12 = vld [vmem:[%s11] sm:$0x1]
    %13 = vrot.lane.b32.xlu0 %v12, 112
    %v14 = vpop.permute.xlu0 %13
    %vm15 = vcmask 982912
    %16 = vst.msk [vmem:[#allocation0] sm:$0x1] %vm15, %v14
    %s17 = scalar_lea.vmem %s0, 13
    %v18 = vld [vmem:[%s17] sm:$0x1]
    %19 = vrot.lane.b32.xlu0 %v18, 104
    %v20 = vpop.permute.xlu0 %19
    %vm21 = vcmask 917312
    %22 = vst.msk [vmem:[#allocation0] sm:$0x1] %vm21, %v20
    %s23 = scalar_lea.vmem %s0, 12
    %v24 = vld [vmem:[%s23] sm:$0x1]
    %25 = vrot.lane.b32.xlu0 %v24, 96
    %v26 = vpop.permute.xlu0 %25
    %vm27 = vcmask 851712
    %28 = vst.msk [vmem:[#allocation0] sm:$0x1] %vm27, %v26
    %s29 = scalar_lea.vmem %s0, 11
    %v30 = vld [vmem:[%s29] sm:$0x1]
    %31 = vrot.lane.b32.xlu0 %v30, 88
    %v32 = vpop.permute.xlu0 %31
    %vm33 = vcmask 786112
    %34 = vst.msk [vmem:[#allocation0] sm:$0x1] %vm33, %v32
    %s35 = scalar_lea.vmem %s0, 10
    %v36 = vld [vmem:[%s35] sm:$0x1]
    %37 = vrot.lane.b32.xlu0 %v36, 80
    %v38 = vpop.permute.xlu0 %37
    %vm39 = vcmask 720512
    %40 = vst.msk [vmem:[#allocation0] sm:$0x1] %vm39, %v38
    %s41 = scalar_lea.vmem %s0, 9
    %v42 = vld [vmem:[%s41] sm:$0x1]
    %43 = vrot.lane.b32.xlu0 %v42, 72
    %v44 = vpop.permute.xlu0 %43
    %vm45 = vcmask 654912
    %46 = vst.msk [vmem:[#allocation0] sm:$0x1] %vm45, %v44
    %s47 = scalar_lea.vmem %s0, 8
    %v48 = vld [vmem:[%s47] sm:$0x1]
    %49 = vrot.lane.b32.xlu0 %v48, 64
    %v50 = vpop.permute.xlu0 %49
    %vm51 = vcmask 589312
    %52 = vst.msk [vmem:[#allocation0] sm:$0x1] %vm51, %v50
    %s53 = scalar_lea.vmem %s0, 7
    %v54 = vld [vmem:[%s53] sm:$0x1]
    %55 = vrot.lane.b32.xlu0 %v54, 56
    %v56 = vpop.permute.xlu0 %55
    %vm57 = vcmask 523712
    %58 = vst.msk [vmem:[#allocation0] sm:$0x1] %vm57, %v56
    %s59 = scalar_lea.vmem %s0, 6
    %v60 = vld [vmem:[%s59] sm:$0x1]
    %61 = vrot.lane.b32.xlu0 %v60, 48
    %v62 = vpop.permute.xlu0 %61
    %vm63 = vcmask 458112
    %64 = vst.msk [vmem:[#allocation0] sm:$0x1] %vm63, %v62
    %s65 = scalar_lea.vmem %s0, 5
    %v66 = vld [vmem:[%s65] sm:$0x1]
    %67 = vrot.lane.b32.xlu0 %v66, 40
    %v68 = vpop.permute.xlu0 %67
    %vm69 = vcmask 392512
    %70 = vst.msk [vmem:[#allocation0] sm:$0x1] %vm69, %v68
    %s71 = scalar_lea.vmem %s0, 4
    %v72 = vld [vmem:[%s71] sm:$0x1]
    %73 = vrot.lane.b32.xlu0 %v72, 32
    %v74 = vpop.permute.xlu0 %73
    %vm75 = vcmask 326912
    %76 = vst.msk [vmem:[#allocation0] sm:$0x1] %vm75, %v74
    %s77 = scalar_lea.vmem %s0, 3
    %v78 = vld [vmem:[%s77] sm:$0x1]
    %79 = vrot.lane.b32.xlu0 %v78, 24
    %v80 = vpop.permute.xlu0 %79
    %vm81 = vcmask 261312
    %82 = vst.msk [vmem:[#allocation0] sm:$0x1] %vm81, %v80
    %s83 = scalar_lea.vmem %s0, 2
    %v84 = vld [vmem:[%s83] sm:$0x1]
    %85 = vrot.lane.b32.xlu0 %v84, 16
    %v86 = vpop.permute.xlu0 %85
    %vm87 = vcmask 195712
    %88 = vst.msk [vmem:[#allocation0] sm:$0x1] %vm87, %v86
    %s89 = scalar_lea.vmem %s0, 1
    %v90 = vld [vmem:[%s89] sm:$0x1]
    %91 = vrot.lane.b32.xlu0 %v90, 8
    %v92 = vpop.permute.xlu0 %91
    %vm93 = vcmask 130112
    %94 = vst.msk [vmem:[#allocation0] sm:$0x1] %vm93, %v92
    %s96 = ssub.s32 2, 1
    %v97 = vld [vmem:[#allocation0] sm:%s96]
    %s99 = ssub.s32 2, 1
    %100 = vst [vmem:[%s1] sm:%s99] %v97

// kernel: residual_block.1
$region0: #{residual_block.1}
  #allocation0 [shape = 'u32[]', space=smem, size = 0x4, offset = 0x4, fixed_abs, tag = 'smem constant byte address 0x4 - core index']
  #allocation1 [shape = 'u32[72,128]{1,0:T(1,128)}', space=vmem, size = 0x9000, scoped, tag = 'internal scratch']
  #allocation2 [shape = 'f32[18,128]{1,0:T(8,128)}', space=vmem, size = 0x3000, scoped, tag = 'scratch operand']
  %s0 = inlined_call_operand.vmem [shape: f32[2,16,128], index: 0, kind: input, shape index: {}]
  %s1 = inlined_call_operand.vmem [shape: f32[3,128,128], index: 1, kind: input, shape index: {}]
  %s2 = inlined_call_operand.vmem [shape: f32[1,128], index: 2, kind: input, shape index: {}]
  %s3 = inlined_call_operand.vmem [shape: f32[3,128,128], index: 3, kind: input, shape index: {}]
  %s4 = inlined_call_operand.vmem [shape: f32[1,128], index: 4, kind: input, shape index: {}]
  %s5 = inlined_call_operand.vmem [shape: f32[128,128], index: 5, kind: input, shape index: {}]
  %s6 = inlined_call_operand.vmem [shape: f32[2,16,128], index: 6, kind: output, shape index: {}]
  %s7 = sld [smem:[#allocation0]]
  $region57: #{residual_block.1} parent=0
    _
  %s9 = ssub.s32 1, %s7
  %s10 = scalar_select 0, %s9, %s7
  loop: start=0, step=1, limit=4
  $region2: #{residual_block.1} parent=0 // loop_pre_header
    _
  $region3: #{residual_block.1} parent=0 // loop_header
    %s12 = sphi 0, %s16
    %p13 = scmp.ge.s32.totalorder %s12, 4
    %s22 = sphi 0, %s24
    %s25 = sphi 0, %s22
    %s26 = sphi 0, %s25
    %s42 = sphi 0, %s26
    %s46 = sphi 0, %s46
    %s48 = sphi 0, %s46
    %s49 = sphi 0, %s48
    %s63 = sphi 0, %s49
    %s67 = sphi 0, %s67
    %s69 = sphi 0, %s67
    %s70 = sphi 0, %s69
    %s84 = sphi 0, %s70
    %s88 = sphi 0, %s88
    %s90 = sphi 0, %s88
    %s91 = sphi 0, %s90
    %s105 = sphi 0, %s91
    %s109 = sphi 0, %s109
    %s111 = sphi 0, %s109
    %s112 = sphi 0, %s111
    %s126 = sphi 0, %s112
    %s130 = sphi 0, %s130
    %s132 = sphi 0, %s130
    %s133 = sphi 0, %s132
    %s147 = sphi 0, %s133
    %s153 = sphi 0, %s155
    %s156 = sphi 0, %s153
    %s157 = sphi 0, %s156
    %s173 = sphi 0, %s157
  $region4: #{residual_block.1} parent=0 // loop_header_branch
    %15 = sbr.rel (%p13) target = $region8
  $region5: #{residual_block.1} parent=0 // loop_body
    %s17 = ssub.s32 %s12, 1
    %s18 = ssub.s32 %s12, 2
    %s19 = sadd.s32 %s12, 1
    %s20 = ssub.s32 %s12, %s19
    %p21 = scmp.eq.s32.totalorder %s20, 0
    %s23 = sadd.s32 %s22, 1
    %s24 = scalar_select %p21, %s22, %s23
    %p27 = pneg %p21
    %p28 = scmp.eq.s32.totalorder %s12, 1
    %p29 = por %p27, %p28
    %p30 = scmp.ne.s32.totalorder %s22, %s25
    %p31 = scmp.eq.s32.totalorder %s12, 0
    %p32 = por %p30, %p31
    %p33 = scmp.ne.s32.totalorder %s22, %s25
    %p34 = scmp.eq.s32.totalorder %s17, 1
    %p35 = por %p33, %p34
    %p36 = scmp.ne.s32.totalorder %s25, %s26
    %p37 = scmp.eq.s32.totalorder %s17, 0
    %p38 = por %p36, %p37
    %p39 = scmp.ne.s32.totalorder %s25, %s26
    %p40 = scmp.eq.s32.totalorder %s18, 1
    %p41 = por %p39, %p40
    %p43 = scmp.ne.s32.totalorder %s26, %s42
    %p44 = scmp.eq.s32.totalorder %s18, 0
    %p45 = por %p43, %p44
    %s47 = sadd.s32 %s46, 1
    %p50 = scmp.eq.s32.totalorder %s12, 1
    %p51 = scmp.ne.s32.totalorder %s46, %s48
    %p52 = scmp.eq.s32.totalorder %s12, 0
    %p53 = por %p51, %p52
    %p54 = scmp.ne.s32.totalorder %s46, %s48
    %p55 = scmp.eq.s32.totalorder %s17, 1
    %p56 = por %p54, %p55
    %p57 = scmp.ne.s32.totalorder %s48, %s49
    %p58 = scmp.eq.s32.totalorder %s17, 0
    %p59 = por %p57, %p58
    %p60 = scmp.ne.s32.totalorder %s48, %s49
    %p61 = scmp.eq.s32.totalorder %s18, 1
    %p62 = por %p60, %p61
    %p64 = scmp.ne.s32.totalorder %s49, %s63
    %p65 = scmp.eq.s32.totalorder %s18, 0
    %p66 = por %p64, %p65
    %s68 = sadd.s32 %s67, 1
    %p71 = scmp.eq.s32.totalorder %s12, 1
    %p72 = scmp.ne.s32.totalorder %s67, %s69
    %p73 = scmp.eq.s32.totalorder %s12, 0
    %p74 = por %p72, %p73
    %p75 = scmp.ne.s32.totalorder %s67, %s69
    %p76 = scmp.eq.s32.totalorder %s17, 1
    %p77 = por %p75, %p76
    %p78 = scmp.ne.s32.totalorder %s69, %s70
    %p79 = scmp.eq.s32.totalorder %s17, 0
    %p80 = por %p78, %p79
    %p81 = scmp.ne.s32.totalorder %s69, %s70
    %p82 = scmp.eq.s32.totalorder %s18, 1
    %p83 = por %p81, %p82
    %p85 = scmp.ne.s32.totalorder %s70, %s84
    %p86 = scmp.eq.s32.totalorder %s18, 0
    %p87 = por %p85, %p86
    %s89 = sadd.s32 %s88, 1
    %p92 = scmp.eq.s32.totalorder %s12, 1
    %p93 = scmp.ne.s32.totalorder %s88, %s90
    %p94 = scmp.eq.s32.totalorder %s12, 0
    %p95 = por %p93, %p94
    %p96 = scmp.ne.s32.totalorder %s88, %s90
    %p97 = scmp.eq.s32.totalorder %s17, 1
    %p98 = por %p96, %p97
    %p99 = scmp.ne.s32.totalorder %s90, %s91
    %p100 = scmp.eq.s32.totalorder %s17, 0
    %p101 = por %p99, %p100
    %p102 = scmp.ne.s32.totalorder %s90, %s91
    %p103 = scmp.eq.s32.totalorder %s18, 1
    %p104 = por %p102, %p103
    %p106 = scmp.ne.s32.totalorder %s91, %s105
    %p107 = scmp.eq.s32.totalorder %s18, 0
    %p108 = por %p106, %p107
    %s110 = sadd.s32 %s109, 1
    %p113 = scmp.eq.s32.totalorder %s12, 1
    %p114 = scmp.ne.s32.totalorder %s109, %s111
    %p115 = scmp.eq.s32.totalorder %s12, 0
    %p116 = por %p114, %p115
    %p117 = scmp.ne.s32.totalorder %s109, %s111
    %p118 = scmp.eq.s32.totalorder %s17, 1
    %p119 = por %p117, %p118
    %p120 = scmp.ne.s32.totalorder %s111, %s112
    %p121 = scmp.eq.s32.totalorder %s17, 0
    %p122 = por %p120, %p121
    %p123 = scmp.ne.s32.totalorder %s111, %s112
    %p124 = scmp.eq.s32.totalorder %s18, 1
    %p125 = por %p123, %p124
    %p127 = scmp.ne.s32.totalorder %s112, %s126
    %p128 = scmp.eq.s32.totalorder %s18, 0
    %p129 = por %p127, %p128
    %s131 = sadd.s32 %s130, 1
    %p134 = scmp.eq.s32.totalorder %s12, 1
    %p135 = scmp.ne.s32.totalorder %s130, %s132
    %p136 = scmp.eq.s32.totalorder %s12, 0
    %p137 = por %p135, %p136
    %p138 = scmp.ne.s32.totalorder %s130, %s132
    %p139 = scmp.eq.s32.totalorder %s17, 1
    %p140 = por %p138, %p139
    %p141 = scmp.ne.s32.totalorder %s132, %s133
    %p142 = scmp.eq.s32.totalorder %s17, 0
    %p143 = por %p141, %p142
    %p144 = scmp.ne.s32.totalorder %s132, %s133
    %p145 = scmp.eq.s32.totalorder %s18, 1
    %p146 = por %p144, %p145
    %p148 = scmp.ne.s32.totalorder %s133, %s147
    %p149 = scmp.eq.s32.totalorder %s18, 0
    %p150 = por %p148, %p149
    %s151 = ssub.s32 %s12, %s19
    %p152 = scmp.eq.s32.totalorder %s151, 0
    %s154 = sadd.s32 %s153, 1
    %s155 = scalar_select %p152, %s153, %s154
    %p158 = pneg %p152
    %p159 = scmp.eq.s32.totalorder %s12, 1
    %p160 = por %p158, %p159
    %p161 = scmp.ne.s32.totalorder %s153, %s156
    %p162 = scmp.eq.s32.totalorder %s12, 0
    %p163 = por %p161, %p162
    %p164 = scmp.ne.s32.totalorder %s153, %s156
    %p165 = scmp.eq.s32.totalorder %s17, 1
    %p166 = por %p164, %p165
    %p167 = scmp.ne.s32.totalorder %s156, %s157
    %p168 = scmp.eq.s32.totalorder %s17, 0
    %p169 = por %p167, %p168
    %p170 = scmp.ne.s32.totalorder %s156, %s157
    %p171 = scmp.eq.s32.totalorder %s18, 1
    %p172 = por %p170, %p171
    %p174 = scmp.ne.s32.totalorder %s157, %s173
    %p175 = scmp.eq.s32.totalorder %s18, 0
    %p176 = por %p174, %p175
    %p177 = scmp.le.s32.totalorder 1, %s12
    %p178 = scmp.lt.s32.totalorder %s12, 3
    %p179 = pnand %p177, %p178
    %p180 = pneg %p179
    // Predicated region
    $region9: #{residual_block.1} parent=5 // pred_check
      _
    $region10: #{residual_block.1} parent=5 // pred_check_branch
      %182 = sbr.rel (%p179) target = $region12
    $region11: #{residual_block.1} parent=5 // pred_region
      %s183 = ssub.s32 %s12, 1
      // Predicated region
      $region13: #{residual_block.1} parent=11 // pred_check
        %p184 = pneg %p59
      $region14: #{residual_block.1} parent=11 // pred_check_branch
        %186 = sbr.rel (%p184) target = $region16
      $region15: #{residual_block.1} parent=11 // pred_region
        _
      $region16: #{residual_block.1} parent=11 // pred_fallthru
        _
      // Predicated region
      $region17: #{residual_block.1} parent=11 // pred_check
        %p187 = pneg %p80
      $region18: #{residual_block.1} parent=11 // pred_check_branch
        %189 = sbr.rel (%p187) target = $region20
      $region19: #{residual_block.1} parent=11 // pred_region
        _
      $region20: #{residual_block.1} parent=11 // pred_fallthru
        _
      // Predicated region
      $region21: #{residual_block.1} parent=11 // pred_check
        %p190 = pneg %p101
      $region22: #{residual_block.1} parent=11 // pred_check_branch
        %192 = sbr.rel (%p190) target = $region24
      $region23: #{residual_block.1} parent=11 // pred_region
        _
      $region24: #{residual_block.1} parent=11 // pred_fallthru
        _
      // Predicated region
      $region25: #{residual_block.1} parent=11 // pred_check
        %p193 = pneg %p122
      $region26: #{residual_block.1} parent=11 // pred_check_branch
        %195 = sbr.rel (%p193) target = $region28
      $region27: #{residual_block.1} parent=11 // pred_region
        _
      $region28: #{residual_block.1} parent=11 // pred_fallthru
        _
      // Predicated region
      $region29: #{residual_block.1} parent=11 // pred_check
        %p196 = pneg %p143
      $region30: #{residual_block.1} parent=11 // pred_check_branch
        %198 = sbr.rel (%p196) target = $region32
      $region31: #{residual_block.1} parent=11 // pred_region
        _
      $region32: #{residual_block.1} parent=11 // pred_fallthru
        _
    $region12: #{residual_block.1} parent=5 // pred_fallthru
      _
    %p199 = scmp.lt.s32.totalorder %s12, 2
    // Predicated region
    $region33: #{residual_block.1} parent=5 // pred_check
      %p200 = pneg %p199
    $region34: #{residual_block.1} parent=5 // pred_check_branch
      %202 = sbr.rel (%p200) target = $region36
    $region35: #{residual_block.1} parent=5 // pred_region
      // Predicated region
      $region37: #{residual_block.1} parent=35 // pred_check
        %p203 = pneg %p32
      $region38: #{residual_block.1} parent=35 // pred_check_branch
        %205 = sbr.rel (%p203) target = $region40
      $region39: #{residual_block.1} parent=35 // pred_region
        %p206 = scmp.lt.s32.totalorder %s12, 1
        %s207 = scalar_select %p206, %s12, 1
        %s208 = smul.addr %s207, 2
        %s209 = smul.addr %s208, 8
        %s210 = scalar_lea.vmem %s0, %s209
      $region40: #{residual_block.1} parent=35 // pred_fallthru
        _
    $region36: #{residual_block.1} parent=5 // pred_fallthru
      _
    %p211 = scmp.le.s32.totalorder 1, %s12
    %p212 = scmp.lt.s32.totalorder %s12, 3
    %p213 = pnand %p211, %p212
    %p214 = pneg %p213
    // Predicated region
    $region41: #{residual_block.1} parent=5 // pred_check
      _
    $region42: #{residual_block.1} parent=5 // pred_check_branch
      %216 = sbr.rel (%p213) target = $region44
    $region43: #{residual_block.1} parent=5 // pred_region
      %s217 = ssub.s32 %s12, 1
      %p218 = scmp.lt.s32.totalorder %s17, 1
      %s219 = scalar_select %p218, %s17, 1
      %s220 = smul.addr %s219, 2
      %s221 = smul.addr %s220, 8
      %s222 = scalar_lea.vmem %s0, %s221
      %p223 = pneg %p38
      %p224 = pneg %p35
      %p225 = pneg %p59
      %p226 = pneg %p56
      %p227 = pneg %p80
      %p228 = pneg %p77
      %p229 = pneg %p101
      %p230 = pneg %p98
      %p231 = pneg %p122
      %p232 = pneg %p119
      %p233 = pneg %p143
      %p234 = pneg %p140
      %p235 = pneg %p169
      %p236 = pneg %p166
      %p237 = scmp.lt.s32.totalorder %s17, 1
      %s238 = scalar_select %p237, %s17, 1
      %s239 = smul.addr %s238, 2
      %s240 = smul.addr %s239, 8
      %s241 = scalar_lea.vmem %s6, %s240
      %p242 = scmp.lt.s32.totalorder %s17, 1
      %s243 = scalar_select %p242, %s17, 1
      %s244 = smul.addr %s243, 2
      %s245 = smul.addr %s244, 8
      %s246 = scalar_lea.vmem %s0, %s245
      %p247 = scmp.lt.s32.totalorder %s17, 1
      %s248 = scalar_select %p247, %s17, 1
      %s249 = smul.addr %s248, 2
      %s250 = smul.addr %s249, 8
      %s251 = scalar_lea.vmem %s6, %s250
      %v252 = vld [vmem:[%s246] sm:$0xff]
      %v253 = vld [vmem:[%s246 + $0x8] sm:$0xff]
      %254 = vst [vmem:[#allocation2 + $0x1] sm:$0xff] %v252
      %255 = vst [vmem:[#allocation2 + $0x9] sm:$0xff] %v253
      %256 = vst [vmem:[#allocation2 - $0x1] sm:$0x2] %v252
      %257 = vst [vmem:[#allocation2 + $0xb] sm:$0x40] %v253
      %v258 = vld [vmem:[#allocation2] sm:$0xff]
      %v259 = vld [vmem:[#allocation2 + $0x8] sm:$0xff]
      %v260 = vld [vmem:[%s1] sm:$0xff]
      %v261 = vld [vmem:[%s1 + $0x8] sm:$0xff]
      %v262 = vld [vmem:[%s1 + $0x10] sm:$0xff]
      %v263 = vld [vmem:[%s1 + $0x18] sm:$0xff]
      %v264 = vld [vmem:[%s1 + $0x20] sm:$0xff]
      %v265 = vld [vmem:[%s1 + $0x28] sm:$0xff]
      %v266 = vld [vmem:[%s1 + $0x30] sm:$0xff]
      %v267 = vld [vmem:[%s1 + $0x38] sm:$0xff]
      %v268 = vld [vmem:[%s1 + $0x40] sm:$0xff]
      %v269 = vld [vmem:[%s1 + $0x48] sm:$0xff]
      %v270 = vld [vmem:[%s1 + $0x50] sm:$0xff]
      %v271 = vld [vmem:[%s1 + $0x58] sm:$0xff]
      %v272 = vld [vmem:[%s1 + $0x60] sm:$0xff]
      %v273 = vld [vmem:[%s1 + $0x68] sm:$0xff]
      %v274 = vld [vmem:[%s1 + $0x70] sm:$0xff]
      %v275 = vld [vmem:[%s1 + $0x78] sm:$0xff]
      %v276 = vld [vmem:[#allocation2 + $0x1] sm:$0xff]
      %v277 = vld [vmem:[#allocation2 + $0x9] sm:$0xff]
      %s278 = scalar_lea.vmem %s1, 128
      %v279 = vld [vmem:[%s278] sm:$0xff]
      %v280 = vld [vmem:[%s278 + $0x8] sm:$0xff]
      %v281 = vld [vmem:[%s278 + $0x10] sm:$0xff]
      %v282 = vld [vmem:[%s278 + $0x18] sm:$0xff]
      %v283 = vld [vmem:[%s278 + $0x20] sm:$0xff]
      %v284 = vld [vmem:[%s278 + $0x28] sm:$0xff]
      %v285 = vld [vmem:[%s278 + $0x30] sm:$0xff]
      %v286 = vld [vmem:[%s278 + $0x38] sm:$0xff]
      %v287 = vld [vmem:[%s278 + $0x40] sm:$0xff]
      %v288 = vld [vmem:[%s278 + $0x48] sm:$0xff]
      %v289 = vld [vmem:[%s278 + $0x50] sm:$0xff]
      %v290 = vld [vmem:[%s278 + $0x58] sm:$0xff]
      %v291 = vld [vmem:[%s278 + $0x60] sm:$0xff]
      %v292 = vld [vmem:[%s278 + $0x68] sm:$0xff]
      %v293 = vld [vmem:[%s278 + $0x70] sm:$0xff]
      %v294 = vld [vmem:[%s278 + $0x78] sm:$0xff]
      %295 = vmatpush.msra.mxu0 %v294
      %296 = vmatpush.msra.mxu0 %v293
      %297 = vmatpush.msra.mxu0 %v292
      %298 = vmatpush.msra.mxu0 %v291
      %299 = vmatpush.msra.mxu0 %v290
      %300 = vmatpush.msra.mxu0 %v289
      %301 = vmatpush.msra.mxu0 %v288
      %302 = vmatpush.msra.mxu0 %v287
      %303 = vmatpush.msra.mxu0 %v286
      %304 = vmatpush.msra.mxu0 %v285
      %305 = vmatpush.msra.mxu0 %v284
      %306 = vmatpush.msra.mxu0 %v283
      %307 = vmatpush.msra.mxu0 %v282
      %308 = vmatpush.msra.mxu0 %v281
      %309 = vmatpush.msra.mxu0 %v280
      %310 = vmatpush.msra.mxu0 %v279
      %311 = vmatmul.f32.gmra.mxu0 %v276
      %v312 = vpop.f32.mrf.mxu0
      %v313 = vadd.f32 0.0, %v312
      %314 = vmatmul.f32.gmra.mxu0 %v277
      %v315 = vpop.f32.mrf.mxu0
      %v316 = vadd.f32 0.0, %v315
      %317 = vdwg.mxu0
      %318 = vmatpush.msra.mxu0 %v275
      %319 = vmatpush.msra.mxu0 %v274
      %320 = vmatpush.msra.mxu0 %v273
      %321 = vmatpush.msra.mxu0 %v272
      %322 = vmatpush.msra.mxu0 %v271
      %323 = vmatpush.msra.mxu0 %v270
      %324 = vmatpush.msra.mxu0 %v269
      %325 = vmatpush.msra.mxu0 %v268
      %326 = vmatpush.msra.mxu0 %v267
      %327 = vmatpush.msra.mxu0 %v266
      %328 = vmatpush.msra.mxu0 %v265
      %329 = vmatpush.msra.mxu0 %v264
      %330 = vmatpush.msra.mxu0 %v263
      %331 = vmatpush.msra.mxu0 %v262
      %332 = vmatpush.msra.mxu0 %v261
      %333 = vmatpush.msra.mxu0 %v260
      %334 = vmatmul.f32.gmra.mxu0 %v258
      %v335 = vpop.f32.mrf.mxu0
      %v336 = vadd.f32 %v313, %v335
      %337 = vmatmul.f32.gmra.mxu0 %v259
      %v338 = vpop.f32.mrf.mxu0
      %v339 = vadd.f32 %v316, %v338
      %340 = vdwg.mxu0
      %v341 = vld [vmem:[#allocation2 + $0x2] sm:$0xff]
      %v342 = vld [vmem:[#allocation2 + $0xa] sm:$0xff]
      %s343 = scalar_lea.vmem %s1, 256
      %v344 = vld [vmem:[%s343] sm:$0xff]
      %v345 = vld [vmem:[%s343 + $0x8] sm:$0xff]
      %v346 = vld [vmem:[%s343 + $0x10] sm:$0xff]
      %v347 = vld [vmem:[%s343 + $0x18] sm:$0xff]
      %v348 = vld [vmem:[%s343 + $0x20] sm:$0xff]
      %v349 = vld [vmem:[%s343 + $0x28] sm:$0xff]
      %v350 = vld [vmem:[%s343 + $0x30] sm:$0xff]
      %v351 = vld [vmem:[%s343 + $0x38] sm:$0xff]
      %v352 = vld [vmem:[%s343 + $0x40] sm:$0xff]
      %v353 = vld [vmem:[%s343 + $0x48] sm:$0xff]
      %v354 = vld [vmem:[%s343 + $0x50] sm:$0xff]
      %v355 = vld [vmem:[%s343 + $0x58] sm:$0xff]
      %v356 = vld [vmem:[%s343 + $0x60] sm:$0xff]
      %v357 = vld [vmem:[%s343 + $0x68] sm:$0xff]
      %v358 = vld [vmem:[%s343 + $0x70] sm:$0xff]
      %v359 = vld [vmem:[%s343 + $0x78] sm:$0xff]
      %360 = vmatpush.msra.mxu0 %v359
      %361 = vmatpush.msra.mxu0 %v358
      %362 = vmatpush.msra.mxu0 %v357
      %363 = vmatpush.msra.mxu0 %v356
      %364 = vmatpush.msra.mxu0 %v355
      %365 = vmatpush.msra.mxu0 %v354
      %366 = vmatpush.msra.mxu0 %v353
      %367 = vmatpush.msra.mxu0 %v352
      %368 = vmatpush.msra.mxu0 %v351
      %369 = vmatpush.msra.mxu0 %v350
      %370 = vmatpush.msra.mxu0 %v349
      %371 = vmatpush.msra.mxu0 %v348
      %372 = vmatpush.msra.mxu0 %v347
      %373 = vmatpush.msra.mxu0 %v346
      %374 = vmatpush.msra.mxu0 %v345
      %375 = vmatpush.msra.mxu0 %v344
      %376 = vmatmul.f32.gmra.mxu0 %v341
      %v377 = vpop.f32.mrf.mxu0
      %v378 = vadd.f32 0.0, %v377
      %379 = vmatmul.f32.gmra.mxu0 %v342
      %v380 = vpop.f32.mrf.mxu0
      %v381 = vadd.f32 0.0, %v380
      %382 = vdwg.mxu0
      %v383 = vadd.f32 %v336, %v378
      %v384 = vadd.f32 %v339, %v381
      %v385 = vld [vmem:[%s2] sm:$0x1]
      %v387 = vperm.slane %v385, 0
      %v389 = vadd.f32 %v383, %v387
      %v390 = vadd.f32 %v384, %v387
      %v391 = vld [vmem:[%s5] sm:$0xff]
      %v392 = vld [vmem:[%s5 + $0x8] sm:$0xff]
      %v393 = vld [vmem:[%s5 + $0x10] sm:$0xff]
      %v394 = vld [vmem:[%s5 + $0x18] sm:$0xff]
      %v395 = vld [vmem:[%s5 + $0x20] sm:$0xff]
      %v396 = vld [vmem:[%s5 + $0x28] sm:$0xff]
      %v397 = vld [vmem:[%s5 + $0x30] sm:$0xff]
      %v398 = vld [vmem:[%s5 + $0x38] sm:$0xff]
      %v399 = vld [vmem:[%s5 + $0x40] sm:$0xff]
      %v400 = vld [vmem:[%s5 + $0x48] sm:$0xff]
      %v401 = vld [vmem:[%s5 + $0x50] sm:$0xff]
      %v402 = vld [vmem:[%s5 + $0x58] sm:$0xff]
      %v403 = vld [vmem:[%s5 + $0x60] sm:$0xff]
      %v404 = vld [vmem:[%s5 + $0x68] sm:$0xff]
      %v405 = vld [vmem:[%s5 + $0x70] sm:$0xff]
      %v406 = vld [vmem:[%s5 + $0x78] sm:$0xff]
      %407 = vmatpush.msra.mxu0 %v406
      %408 = vmatpush.msra.mxu0 %v405
      %409 = vmatpush.msra.mxu0 %v404
      %410 = vmatpush.msra.mxu0 %v403
      %411 = vmatpush.msra.mxu0 %v402
      %412 = vmatpush.msra.mxu0 %v401
      %413 = vmatpush.msra.mxu0 %v400
      %414 = vmatpush.msra.mxu0 %v399
      %415 = vmatpush.msra.mxu0 %v398
      %416 = vmatpush.msra.mxu0 %v397
      %417 = vmatpush.msra.mxu0 %v396
      %418 = vmatpush.msra.mxu0 %v395
      %419 = vmatpush.msra.mxu0 %v394
      %420 = vmatpush.msra.mxu0 %v393
      %421 = vmatpush.msra.mxu0 %v392
      %422 = vmatpush.msra.mxu0 %v391
      %423 = vmatmul.f32.gmra.mxu0 %v389
      %v424 = vpop.f32.mrf.mxu0
      %v425 = vadd.f32 0.0, %v424
      %426 = vmatmul.f32.gmra.mxu0 %v390
      %v427 = vpop.f32.mrf.mxu0
      %v428 = vadd.f32 0.0, %v427
      %429 = vdwg.mxu0
      %v430 = vadd.f32 %v425, %v428
      %v431 = vrot.slane %v430, 4
      %v432 = vadd.f32 %v430, %v431
      %v433 = vrot.slane %v432, 2
      %v434 = vadd.f32 %v432, %v433
      %v435 = vrot.slane %v434, 1
      %v436 = vadd.f32 %v434, %v435
      %v437 = vmul.f32 %v389, %v389
      %v438 = vmul.f32 %v390, %v390
      %439 = vmatpush.msra.mxu0 %v406
      %440 = vmatpush.msra.mxu0 %v405
      %441 = vmatpush.msra.mxu0 %v404
      %442 = vmatpush.msra.mxu0 %v403
      %443 = vmatpush.msra.mxu0 %v402
      %444 = vmatpush.msra.mxu0 %v401
      %445 = vmatpush.msra.mxu0 %v400
      %446 = vmatpush.msra.mxu0 %v399
      %447 = vmatpush.msra.mxu0 %v398
      %448 = vmatpush.msra.mxu0 %v397
      %449 = vmatpush.msra.mxu0 %v396
      %450 = vmatpush.msra.mxu0 %v395
      %451 = vmatpush.msra.mxu0 %v394
      %452 = vmatpush.msra.mxu0 %v393
      %453 = vmatpush.msra.mxu0 %v392
      %454 = vmatpush.msra.mxu0 %v391
      %455 = vmatmul.f32.gmra.mxu0 %v437
      %v456 = vpop.f32.mrf.mxu0
      %v457 = vadd.f32 0.0, %v456
      %458 = vmatmul.f32.gmra.mxu0 %v438
      %v459 = vpop.f32.mrf.mxu0
      %v460 = vadd.f32 0.0, %v459
      %461 = vdwg.mxu0
      %v462 = vadd.f32 %v457, %v460
      %v463 = vrot.slane %v462, 4
      %v464 = vadd.f32 %v462, %v463
      %v465 = vrot.slane %v464, 2
      %v466 = vadd.f32 %v464, %v465
      %v467 = vrot.slane %v466, 1
      %v468 = vadd.f32 %v466, %v467
      %v469 = vmul.f32 %v436, %v436
      %v470 = vsub.f32 %v468, %v469
      %v471 = vsub.f32 %v389, %v436
      %v472 = vsub.f32 %v390, %v436
      %v473 = vadd.f32 %v470, 1e-05
      %v474 = vrsqrt.pop %v473
      %v475 = vmul.f32 %v474, %v473
      %v476 = vmul.f32 %v475, %v474
      %v477 = vmul.f32 0.5, %v476
      %v478 = vsub.f32 1.5, %v477
      %v479 = vmul.f32 %v474, %v478
      %vm480 = vweird.f32 %v473
      %vm481 = vweird.f32 %v474
      %vm482 = vmor %vm480, %vm481
      %v483 = vsel %vm482, %v474, %v479
      %v484 = vmul.f32 %v471, %v483
      %v485 = vmul.f32 %v472, %v483
      %v486 = vmax.f32 %v484, 0.0
      %v487 = vmax.f32 %v485, 0.0
      %488 = vst [vmem:[#allocation2 + $0x1] sm:$0xff] %v486
      %489 = vst [vmem:[#allocation2 + $0x9] sm:$0xff] %v487
      %490 = vst [vmem:[#allocation2 - $0x1] sm:$0x2] %v486
      %491 = vst [vmem:[#allocation2 + $0xb] sm:$0x40] %v487
      %v492 = vld [vmem:[#allocation2] sm:$0xff]
      %v493 = vld [vmem:[#allocation2 + $0x8] sm:$0xff]
      %v494 = vld [vmem:[%s3] sm:$0xff]
      %v495 = vld [vmem:[%s3 + $0x8] sm:$0xff]
      %v496 = vld [vmem:[%s3 + $0x10] sm:$0xff]
      %v497 = vld [vmem:[%s3 + $0x18] sm:$0xff]
      %v498 = vld [vmem:[%s3 + $0x20] sm:$0xff]
      %v499 = vld [vmem:[%s3 + $0x28] sm:$0xff]
      %v500 = vld [vmem:[%s3 + $0x30] sm:$0xff]
      %v501 = vld [vmem:[%s3 + $0x38] sm:$0xff]
      %v502 = vld [vmem:[%s3 + $0x40] sm:$0xff]
      %v503 = vld [vmem:[%s3 + $0x48] sm:$0xff]
      %v504 = vld [vmem:[%s3 + $0x50] sm:$0xff]
      %v505 = vld [vmem:[%s3 + $0x58] sm:$0xff]
      %v506 = vld [vmem:[%s3 + $0x60] sm:$0xff]
      %v507 = vld [vmem:[%s3 + $0x68] sm:$0xff]
      %v508 = vld [vmem:[%s3 + $0x70] sm:$0xff]
      %v509 = vld [vmem:[%s3 + $0x78] sm:$0xff]
      %v510 = vld [vmem:[#allocation2 + $0x1] sm:$0xff]
      %v511 = vld [vmem:[#allocation2 + $0x9] sm:$0xff]
      %s512 = scalar_lea.vmem %s3, 128
      %v513 = vld [vmem:[%s512] sm:$0xff]
      %v514 = vld [vmem:[%s512 + $0x8] sm:$0xff]
      %v515 = vld [vmem:[%s512 + $0x10] sm:$0xff]
      %v516 = vld [vmem:[%s512 + $0x18] sm:$0xff]
      %v517 = vld [vmem:[%s512 + $0x20] sm:$0xff]
      %v518 = vld [vmem:[%s512 + $0x28] sm:$0xff]
      %v519 = vld [vmem:[%s512 + $0x30] sm:$0xff]
      %v520 = vld [vmem:[%s512 + $0x38] sm:$0xff]
      %v521 = vld [vmem:[%s512 + $0x40] sm:$0xff]
      %v522 = vld [vmem:[%s512 + $0x48] sm:$0xff]
      %v523 = vld [vmem:[%s512 + $0x50] sm:$0xff]
      %v524 = vld [vmem:[%s512 + $0x58] sm:$0xff]
      %v525 = vld [vmem:[%s512 + $0x60] sm:$0xff]
      %v526 = vld [vmem:[%s512 + $0x68] sm:$0xff]
      %v527 = vld [vmem:[%s512 + $0x70] sm:$0xff]
      %v528 = vld [vmem:[%s512 + $0x78] sm:$0xff]
      %529 = vmatpush.msra.mxu0 %v528
      %530 = vmatpush.msra.mxu0 %v527
      %531 = vmatpush.msra.mxu0 %v526
      %532 = vmatpush.msra.mxu0 %v525
      %533 = vmatpush.msra.mxu0 %v524
      %534 = vmatpush.msra.mxu0 %v523
      %535 = vmatpush.msra.mxu0 %v522
      %536 = vmatpush.msra.mxu0 %v521
      %537 = vmatpush.msra.mxu0 %v520
      %538 = vmatpush.msra.mxu0 %v519
      %539 = vmatpush.msra.mxu0 %v518
      %540 = vmatpush.msra.mxu0 %v517
      %541 = vmatpush.msra.mxu0 %v516
      %542 = vmatpush.msra.mxu0 %v515
      %543 = vmatpush.msra.mxu0 %v514
      %544 = vmatpush.msra.mxu0 %v513
      %545 = vmatmul.f32.gmra.mxu0 %v510
      %v546 = vpop.f32.mrf.mxu0
      %v547 = vadd.f32 0.0, %v546
      %548 = vmatmul.f32.gmra.mxu0 %v511
      %v549 = vpop.f32.mrf.mxu0
      %v550 = vadd.f32 0.0, %v549
      %551 = vdwg.mxu0
      %552 = vmatpush.msra.mxu0 %v509
      %553 = vmatpush.msra.mxu0 %v508
      %554 = vmatpush.msra.mxu0 %v507
      %555 = vmatpush.msra.mxu0 %v506
      %556 = vmatpush.msra.mxu0 %v505
      %557 = vmatpush.msra.mxu0 %v504
      %558 = vmatpush.msra.mxu0 %v503
      %559 = vmatpush.msra.mxu0 %v502
      %560 = vmatpush.msra.mxu0 %v501
      %561 = vmatpush.msra.mxu0 %v500
      %562 = vmatpush.msra.mxu0 %v499
      %563 = vmatpush.msra.mxu0 %v498
      %564 = vmatpush.msra.mxu0 %v497
      %565 = vmatpush.msra.mxu0 %v496
      %566 = vmatpush.msra.mxu0 %v495
      %567 = vmatpush.msra.mxu0 %v494
      %568 = vmatmul.f32.gmra.mxu0 %v492
      %v569 = vpop.f32.mrf.mxu0
      %v570 = vadd.f32 %v547, %v569
      %571 = vmatmul.f32.gmra.mxu0 %v493
      %v572 = vpop.f32.mrf.mxu0
      %v573 = vadd.f32 %v550, %v572
      %574 = vdwg.mxu0
      %v575 = vld [vmem:[#allocation2 + $0x2] sm:$0xff]
      %v576 = vld [vmem:[#allocation2 + $0xa] sm:$0xff]
      %s577 = scalar_lea.vmem %s3, 256
      %v578 = vld [vmem:[%s577] sm:$0xff]
      %v579 = vld [vmem:[%s577 + $0x8] sm:$0xff]
      %v580 = vld [vmem:[%s577 + $0x10] sm:$0xff]
      %v581 = vld [vmem:[%s577 + $0x18] sm:$0xff]
      %v582 = vld [vmem:[%s577 + $0x20] sm:$0xff]
      %v583 = vld [vmem:[%s577 + $0x28] sm:$0xff]
      %v584 = vld [vmem:[%s577 + $0x30] sm:$0xff]
      %v585 = vld [vmem:[%s577 + $0x38] sm:$0xff]
      %v586 = vld [vmem:[%s577 + $0x40] sm:$0xff]
      %v587 = vld [vmem:[%s577 + $0x48] sm:$0xff]
      %v588 = vld [vmem:[%s577 + $0x50] sm:$0xff]
      %v589 = vld [vmem:[%s577 + $0x58] sm:$0xff]
      %v590 = vld [vmem:[%s577 + $0x60] sm:$0xff]
      %v591 = vld [vmem:[%s577 + $0x68] sm:$0xff]
      %v592 = vld [vmem:[%s577 + $0x70] sm:$0xff]
      %v593 = vld [vmem:[%s577 + $0x78] sm:$0xff]
      %594 = vmatpush.msra.mxu0 %v593
      %595 = vmatpush.msra.mxu0 %v592
      %596 = vmatpush.msra.mxu0 %v591
      %597 = vmatpush.msra.mxu0 %v590
      %598 = vmatpush.msra.mxu0 %v589
      %599 = vmatpush.msra.mxu0 %v588
      %600 = vmatpush.msra.mxu0 %v587
      %601 = vmatpush.msra.mxu0 %v586
      %602 = vmatpush.msra.mxu0 %v585
      %603 = vmatpush.msra.mxu0 %v584
      %604 = vmatpush.msra.mxu0 %v583
      %605 = vmatpush.msra.mxu0 %v582
      %606 = vmatpush.msra.mxu0 %v581
      %607 = vmatpush.msra.mxu0 %v580
      %608 = vmatpush.msra.mxu0 %v579
      %609 = vmatpush.msra.mxu0 %v578
      %610 = vmatmul.f32.gmra.mxu0 %v575
      %v611 = vpop.f32.mrf.mxu0
      %v612 = vadd.f32 0.0, %v611
      %613 = vmatmul.f32.gmra.mxu0 %v576
      %v614 = vpop.f32.mrf.mxu0
      %v615 = vadd.f32 0.0, %v614
      %616 = vdwg.mxu0
      %v617 = vadd.f32 %v570, %v612
      %v618 = vadd.f32 %v573, %v615
      %v619 = vld [vmem:[%s4] sm:$0x1]
      %v621 = vperm.slane %v619, 0
      %v623 = vadd.f32 %v617, %v621
      %v624 = vadd.f32 %v618, %v621
      %v625 = vld [vmem:[%s5] sm:$0xff]
      %v626 = vld [vmem:[%s5 + $0x8] sm:$0xff]
      %v627 = vld [vmem:[%s5 + $0x10] sm:$0xff]
      %v628 = vld [vmem:[%s5 + $0x18] sm:$0xff]
      %v629 = vld [vmem:[%s5 + $0x20] sm:$0xff]
      %v630 = vld [vmem:[%s5 + $0x28] sm:$0xff]
      %v631 = vld [vmem:[%s5 + $0x30] sm:$0xff]
      %v632 = vld [vmem:[%s5 + $0x38] sm:$0xff]
      %v633 = vld [vmem:[%s5 + $0x40] sm:$0xff]
      %v634 = vld [vmem:[%s5 + $0x48] sm:$0xff]
      %v635 = vld [vmem:[%s5 + $0x50] sm:$0xff]
      %v636 = vld [vmem:[%s5 + $0x58] sm:$0xff]
      %v637 = vld [vmem:[%s5 + $0x60] sm:$0xff]
      %v638 = vld [vmem:[%s5 + $0x68] sm:$0xff]
      %v639 = vld [vmem:[%s5 + $0x70] sm:$0xff]
      %v640 = vld [vmem:[%s5 + $0x78] sm:$0xff]
      %641 = vmatpush.msra.mxu0 %v640
      %642 = vmatpush.msra.mxu0 %v639
      %643 = vmatpush.msra.mxu0 %v638
      %644 = vmatpush.msra.mxu0 %v637
      %645 = vmatpush.msra.mxu0 %v636
      %646 = vmatpush.msra.mxu0 %v635
      %647 = vmatpush.msra.mxu0 %v634
      %648 = vmatpush.msra.mxu0 %v633
      %649 = vmatpush.msra.mxu0 %v632
      %650 = vmatpush.msra.mxu0 %v631
      %651 = vmatpush.msra.mxu0 %v630
      %652 = vmatpush.msra.mxu0 %v629
      %653 = vmatpush.msra.mxu0 %v628
      %654 = vmatpush.msra.mxu0 %v627
      %655 = vmatpush.msra.mxu0 %v626
      %656 = vmatpush.msra.mxu0 %v625
      %657 = vmatmul.f32.gmra.mxu0 %v623
      %v658 = vpop.f32.mrf.mxu0
      %v659 = vadd.f32 0.0, %v658
      %660 = vmatmul.f32.gmra.mxu0 %v624
      %v661 = vpop.f32.mrf.mxu0
      %v662 = vadd.f32 0.0, %v661
      %663 = vdwg.mxu0
      %v664 = vadd.f32 %v659, %v662
      %v665 = vrot.slane %v664, 4
      %v666 = vadd.f32 %v664, %v665
      %v667 = vrot.slane %v666, 2
      %v668 = vadd.f32 %v666, %v667
      %v669 = vrot.slane %v668, 1
      %v670 = vadd.f32 %v668, %v669
      %v671 = vmul.f32 %v623, %v623
      %v672 = vmul.f32 %v624, %v624
      %673 = vmatpush.msra.mxu0 %v640
      %674 = vmatpush.msra.mxu0 %v639
      %675 = vmatpush.msra.mxu0 %v638
      %676 = vmatpush.msra.mxu0 %v637
      %677 = vmatpush.msra.mxu0 %v636
      %678 = vmatpush.msra.mxu0 %v635
      %679 = vmatpush.msra.mxu0 %v634
      %680 = vmatpush.msra.mxu0 %v633
      %681 = vmatpush.msra.mxu0 %v632
      %682 = vmatpush.msra.mxu0 %v631
      %683 = vmatpush.msra.mxu0 %v630
      %684 = vmatpush.msra.mxu0 %v629
      %685 = vmatpush.msra.mxu0 %v628
      %686 = vmatpush.msra.mxu0 %v627
      %687 = vmatpush.msra.mxu0 %v626
      %688 = vmatpush.msra.mxu0 %v625
      %689 = vmatmul.f32.gmra.mxu0 %v671
      %v690 = vpop.f32.mrf.mxu0
      %v691 = vadd.f32 0.0, %v690
      %692 = vmatmul.f32.gmra.mxu0 %v672
      %v693 = vpop.f32.mrf.mxu0
      %v694 = vadd.f32 0.0, %v693
      %695 = vdwg.mxu0
      %v696 = vadd.f32 %v691, %v694
      %v697 = vrot.slane %v696, 4
      %v698 = vadd.f32 %v696, %v697
      %v699 = vrot.slane %v698, 2
      %v700 = vadd.f32 %v698, %v699
      %v701 = vrot.slane %v700, 1
      %v702 = vadd.f32 %v700, %v701
      %v703 = vmul.f32 %v670, %v670
      %v704 = vsub.f32 %v702, %v703
      %v705 = vsub.f32 %v623, %v670
      %v706 = vsub.f32 %v624, %v670
      %v707 = vadd.f32 %v704, 1e-05
      %v708 = vrsqrt.pop %v707
      %v709 = vmul.f32 %v708, %v707
      %v710 = vmul.f32 %v709, %v708
      %v711 = vmul.f32 0.5, %v710
      %v712 = vsub.f32 1.5, %v711
      %v713 = vmul.f32 %v708, %v712
      %vm714 = vweird.f32 %v707
      %vm715 = vweird.f32 %v708
      %vm716 = vmor %vm714, %vm715
      %v717 = vsel %vm716, %v708, %v713
      %v718 = vmul.f32 %v705, %v717
      %v719 = vmul.f32 %v706, %v717
      %v720 = vadd.f32 %v252, %v718
      %v721 = vadd.f32 %v253, %v719
      %722 = vst [vmem:[%s251] sm:$0xff] %v720
      %723 = vst [vmem:[%s251 + $0x8] sm:$0xff] %v721
      %p724 = scmp.lt.s32.totalorder %s17, 1
      %s725 = scalar_select %p724, %s17, 1
      %s726 = smul.addr %s725, 2
      %s727 = smul.addr %s726, 8
      %s728 = scalar_lea.vmem %s6, %s727
      // Predicated region
      $region45: #{residual_block.1} parent=43 // pred_check
        %p729 = pneg %p166
      $region46: #{residual_block.1} parent=43 // pred_check_branch
        %731 = sbr.rel (%p729) target = $region48
      $region47: #{residual_block.1} parent=43 // pred_region
        _
      $region48: #{residual_block.1} parent=43 // pred_fallthru
        _
    $region44: #{residual_block.1} parent=5 // pred_fallthru
      _
    %p732 = scmp.le.s32.totalorder 2, %s12
    // Predicated region
    $region49: #{residual_block.1} parent=5 // pred_check
      %p733 = pneg %p732
    $region50: #{residual_block.1} parent=5 // pred_check_branch
      %735 = sbr.rel (%p733) target = $region52
    $region51: #{residual_block.1} parent=5 // pred_region
      %s736 = ssub.s32 %s12, 2
      // Predicated region
      $region53: #{residual_block.1} parent=51 // pred_check
        %p737 = pneg %p172
      $region54: #{residual_block.1} parent=51 // pred_check_branch
        %739 = sbr.rel (%p737) target = $region56
      $region55: #{residual_block.1} parent=51 // pred_region
        %p740 = scmp.lt.s32.totalorder %s18, 1
        %s741 = scalar_select %p740, %s18, 1
        %s742 = smul.addr %s741, 2
        %s743 = smul.addr %s742, 8
        %s744 = scalar_lea.vmem %s6, %s743
      $region56: #{residual_block.1} parent=51 // pred_fallthru
        _
    $region52: #{residual_block.1} parent=5 // pred_fallthru
      _
  $region6: #{residual_block.1} parent=0 // loop_footer
    %s16 = sadd.s32 1, %s12
  $region7: #{residual_block.1} parent=0 // loop_footer_branch
    %11 = sbr.rel target = $region3
  $region8: #{residual_block.1} parent=0 // loop_exit
    _

</llo_original>
